<compile_context>
chip_gen: v6e
topology: v6e:2x2x1
jax: 0.10.0
libtpu: 0.0.40
codegen_flags: <defaults>
</compile_context>

<pallas_src>
import functools

import jax
import jax.numpy as jnp
from jax.experimental import pallas as pl
from jax.experimental.pallas import tpu as pltpu


def _round_up(v, m):
    return ((v + m - 1) // m) * m


def _vmem_budget_bytes():
    """Per-generation VMEM budget: ~0.75 * physical, capped at 100 MiB."""
    cap = 64 << 20  # conservative fallback (v7x-sized)
    try:
        info = pltpu.get_tpu_info()
        cap = int(getattr(info, "vmem_capacity_bytes", cap)) or cap
    except Exception:
        pass
    return int(min((cap * 3) // 4, 100 << 20))


def _estimate_vmem_bytes(tn, tc, C, HW, KP, isz, wsz, x_sub, w_sub, weight_resident):
    """Conservative VMEM usage estimate (double-buffered blocks + output)."""
    hw_lane = _round_up(HW, 128)
    x_b = 2 * tn * _round_up(tc, x_sub) * hw_lane * isz          # x blocks (2 bufs)
    if weight_resident:
        w_b = 2 * _round_up(C, w_sub) * KP * wsz                 # full W^T
    else:
        w_b = 2 * _round_up(tc, w_sub) * KP * wsz                # W^T chunk
    b_b = 2 * 8 * KP * 4                                         # bias
    o_b = 3 * _round_up(tn, 8) * KP * 4                          # output blocks
    return x_b + w_b + b_b + o_b


def resnet_decoder_kernel(x_ref, w_ref, b_ref, o_ref, *, inv_hw, tc, weight_resident):
    # x_ref: (TN, TC, HW)   w_ref: (C, KP) [resident] or (TC, KP) [chunked]
    # b_ref: (1, KP) f32    o_ref: (TN, KP) f32 (resident across the C axis)
    c = pl.program_id(1)

    @pl.when(c == 0)
    def _init():
        o_ref[...] = jnp.zeros_like(o_ref)

    # Spatial sum over this channel chunk; keep the big block in native dtype,
    # accumulate the lane-reduce in f32 (no materialized up-cast of x).
    pooled = jnp.sum(x_ref[...], axis=-1, dtype=jnp.float32)          # (TN, TC)

    if weight_resident:
        c0 = pl.multiple_of(c * tc, tc)
        w_chunk = w_ref[pl.ds(c0, tc), :]                             # (TC, KP)
    else:
        w_chunk = w_ref[...]                                          # (TC, KP)

    # No per-step f32 cast of the weight: use native MXU dtype, f32 accumulation.
    if w_chunk.dtype == jnp.bfloat16 or w_chunk.dtype == jnp.float16:
        pooled = pooled.astype(w_chunk.dtype)

    o_ref[...] += jnp.dot(pooled, w_chunk, preferred_element_type=jnp.float32)

    @pl.when(c == pl.num_programs(1) - 1)
    def _finalize():
        # Single mean scale + bias on the small (TN, KP) resident accumulator.
        o_ref[...] = o_ref[...] * inv_hw + b_ref[...]


def resnet_decoder(x_nchw, weight, bias, *, tn=None, tc=None):
    """Forward of ResnetDecoder.

    x_nchw: (N, C, H, W)   weight: (n_classes, C)   bias: (n_classes,)
    Returns (N, n_classes) float32.
    """
    N, C, H, W = x_nchw.shape
    n_classes = weight.shape[0]
    HW = H * W

    # Lane-dense output / MXU N-dimension: pad classes to a multiple of 128.
    KP = _round_up(max(n_classes, 1), 128)

    isz = jnp.dtype(x_nchw.dtype).itemsize
    wsz = jnp.dtype(weight.dtype).itemsize
    x_sub = max(8, 32 // max(isz, 1))   # packed sublane tile: 8 f32, 16 bf16, 32 int8
    w_sub = max(8, 32 // max(wsz, 1))

    budget = _vmem_budget_bytes()

    # Keep the whole transposed weight resident in VMEM (constant index_map ->
    # fetched once for the entire grid) unless it would eat too much budget.
    full_w_bytes = 2 * _round_up(C, w_sub) * KP * wsz
    weight_resident = full_w_bytes <= (2 * budget) // 5

    # ---- tile candidates: divisors of N / C, no jnp.pad of x in HBM ----
    tn_cands = [d for d in range(N, 0, -1) if N % d == 0 and (d % 8 == 0 or d == N)]
    multi = [d for d in tn_cands if N // d >= 2]
    if multi:
        # keep >= 2 N tiles so both v7x TensorCores get work
        tn_cands = multi
    capped = [d for d in tn_cands if d <= 128]
    tn_cands = capped if capped else [min(tn_cands)]

    tc_cands = [d for d in range(C, 0, -1) if C % d == 0 and (d % x_sub == 0 or d == C)]

    def est_fn(t_n, t_c):
        return _estimate_vmem_bytes(t_n, t_c, C, HW, KP, isz, wsz, x_sub, w_sub,
                                    weight_resident)

    if tn is not None or tc is not None:
        tn_sel = tn if tn is not None else tn_cands[0]
        tc_sel = tc if tc is not None else tc_cands[0]
        assert N % tn_sel == 0 and (tn_sel % 8 == 0 or tn_sel == N), "tn must divide N"
        assert C % tc_sel == 0 and (tc_sel % x_sub == 0 or tc_sel == C), "tc must divide C"
        est = est_fn(tn_sel, tc_sel)
    else:
        tn_sel = tc_sel = None
        est = None
        for t_n in tn_cands:                      # largest N tile first
            for t_c in tc_cands:                  # largest C chunk that fits
                e = est_fn(t_n, t_c)
                if e <= budget:
                    tn_sel, tc_sel, est = t_n, t_c, e
                    break
            if tn_sel is not None:
                break
        if tn_sel is None:                        # nothing fits: smallest tiles
            tn_sel, tc_sel = tn_cands[-1], tc_cands[-1]
            est = est_fn(tn_sel, tc_sel)

    # vmem_limit: generous within the per-generation budget, but never below the
    # usage estimate (floor-checked, per review).
    vmem_limit = int(min(budget, max(2 * est, 32 << 20)))
    vmem_limit = int(max(vmem_limit, est + (4 << 20)))

    # Free view of x (no copy, no padding).
    x3 = x_nchw.reshape(N, C, HW)

    # Pre-transposed weight (C, KP) in its native dtype; f32 bias (1, KP).
    wT = jnp.zeros((C, KP), dtype=weight.dtype).at[:, :n_classes].set(weight.T)
    b2 = jnp.zeros((1, KP), dtype=jnp.float32).at[0, :n_classes].set(
        bias.astype(jnp.float32))

    grid = (N // tn_sel, C // tc_sel)
    inv_hw = 1.0 / float(HW)

    if weight_resident:
        w_spec = pl.BlockSpec((C, KP), lambda n, c: (0, 0))          # fetched once
    else:
        w_spec = pl.BlockSpec((tc_sel, KP), lambda n, c: (c, 0))     # streamed chunks

    out = pl.pallas_call(
        functools.partial(resnet_decoder_kernel, inv_hw=inv_hw, tc=tc_sel,
                          weight_resident=weight_resident),
        out_shape=jax.ShapeDtypeStruct((N, KP), jnp.float32),
        grid_spec=pltpu.PrefetchScalarGridSpec(
            num_scalar_prefetch=0,
            grid=grid,
            in_specs=[
                pl.BlockSpec((tn_sel, tc_sel, HW), lambda n, c: (n, c, 0)),   # x
                w_spec,                                                        # W^T
                pl.BlockSpec((1, KP), lambda n, c: (0, 0)),                    # bias
            ],
            out_specs=pl.BlockSpec((tn_sel, KP), lambda n, c: (n, 0)),
        ),
        compiler_params=pltpu.CompilerParams(
            dimension_semantics=("parallel", "arbitrary"),
            vmem_limit_bytes=vmem_limit,
        ),
    )(x3, wT, b2)

    return out[:, :n_classes]


if __name__ == "__main__":
    # Small shapes consistent with the module: batch=2, channels=4, spatial=16x16.
    N, C, H, W = 2, 4, 16, 16
    n_classes = 10

    key = jax.random.PRNGKey(0)
    kx, kw, kb = jax.random.split(key, 3)

    x = jax.random.normal(kx, (N, C, H, W), dtype=jnp.float32)
    # Linear(in_features=C, out_features=n_classes) parameters.
    weight = jax.random.normal(kw, (n_classes, C), dtype=jnp.float32) * 0.1
    bias = jax.random.normal(kb, (n_classes,), dtype=jnp.float32) * 0.1

    out = resnet_decoder(x, weight, bias)
    out = jax.block_until_ready(out)

    # Reference check in plain JAX (same math as the PyTorch forward).
    ref = jnp.mean(x, axis=(2, 3)) @ weight.T + bias
    assert out.shape == (N, n_classes)
    assert jnp.allclose(out, ref, atol=1e-5, rtol=1e-5)

    print("KERNEL_OK")
</pallas_src>

<mosaic_0001>
module attributes {stable_mosaic.version = 11 : i64} {
  func.func @resnet_decoder_kernel(%arg0: i32, %arg1: i32, %arg2: memref<2x4x256xf32, #tpu.memory_space<vmem>>, %arg3: memref<4x128xf32, #tpu.memory_space<vmem>>, %arg4: memref<1x128xf32, #tpu.memory_space<vmem>>, %arg5: memref<2x128xf32, #tpu.memory_space<vmem>>) attributes {dimension_semantics = [#tpu.dimension_semantics<parallel>, #tpu.dimension_semantics<arbitrary>], iteration_bounds = array<i64: 1, 1>, scalar_prefetch = 0 : i64, scratch_operands = 0 : i64, tpu.core_type = #tpu.core_type<tc>, window_params = [{transform_indices = @transform_0, window_bounds = array<i64: 2, 4, 256>}, {pipeline_mode = #tpu.pipeline_mode<synchronous>, transform_indices = @transform_1, window_bounds = array<i64: 4, 128>}, {pipeline_mode = #tpu.pipeline_mode<synchronous>, transform_indices = @transform_2, window_bounds = array<i64: 1, 128>}, {transform_indices = @transform_3, window_bounds = array<i64: 2, 128>}]} {
    %c0_i32 = arith.constant 0 : i32
    %0 = arith.cmpi eq, %arg1, %c0_i32 : i32
    %1 = arith.extui %0 : i1 to i32
    %c0_i32_0 = arith.constant 0 : i32
    %2 = arith.cmpi ne, %1, %c0_i32_0 : i32
    scf.if %2 {
      %cst_11 = arith.constant 0.000000e+00 : f32
      %16 = vector.broadcast %cst_11 : f32 to vector<2x128xf32>
      %c0_12 = arith.constant 0 : index
      %c0_13 = arith.constant 0 : index
      %17 = vector.load %arg5[%c0_12, %c0_13] : memref<2x128xf32, #tpu.memory_space<vmem>>, vector<2x128xf32>
      tpu.vector_store %arg5[%c0_12, %c0_13], %16 {strides = array<i32>} : memref<2x128xf32, #tpu.memory_space<vmem>>, vector<2x128xf32>,
    } else {
    }
    %c0 = arith.constant 0 : index
    %c0_1 = arith.constant 0 : index
    %c0_2 = arith.constant 0 : index
    %3 = vector.load %arg2[%c0, %c0_1, %c0_2] : memref<2x4x256xf32, #tpu.memory_space<vmem>>, vector<2x4x256xf32>
    %cst = arith.constant dense<0.000000e+00> : vector<2x4xf32>
    %4 = vector.multi_reduction <add>, %3, %cst [2] : vector<2x4x256xf32> to vector<2x4xf32>
    %c4_i32 = arith.constant 4 : i32
    %5 = arith.muli %arg1, %c4_i32 : i32
    %6 = tpu.assume_multiple %5, 4 : i32
    %7 = arith.index_cast %6 : i32 to index
    %c0_3 = arith.constant 0 : index
    %8 = vector.load %arg3[%7, %c0_3] : memref<4x128xf32, #tpu.memory_space<vmem>>, vector<4x128xf32>
    %c0_4 = arith.constant 0 : index
    %c0_5 = arith.constant 0 : index
    %9 = vector.load %arg5[%c0_4, %c0_5] : memref<2x128xf32, #tpu.memory_space<vmem>>, vector<2x128xf32>
    %cst_6 = arith.constant dense<0.000000e+00> : vector<2x128xf32>
    %10 = tpu.matmul %4, %8, %cst_6 {dimension_numbers = #tpu.dot_dimension_numbers<[1], [0], [0], [1], [0, 0, 1, 1], [], []>} : vector<2x4xf32>, vector<4x128xf32>, vector<2x128xf32> -> vector<2x128xf32>
    %11 = arith.addf %9, %10 : vector<2x128xf32>
    %c0_7 = arith.constant 0 : index
    %c0_8 = arith.constant 0 : index
    %12 = vector.load %arg5[%c0_7, %c0_8] : memref<2x128xf32, #tpu.memory_space<vmem>>, vector<2x128xf32>
    tpu.vector_store %arg5[%c0_7, %c0_8], %11 {strides = array<i32>} : memref<2x128xf32, #tpu.memory_space<vmem>>, vector<2x128xf32>,
    %c0_i32_9 = arith.constant 0 : i32
    %13 = arith.cmpi eq, %arg1, %c0_i32_9 : i32
    %14 = arith.extui %13 : i1 to i32
    %c0_i32_10 = arith.constant 0 : i32
    %15 = arith.cmpi ne, %14, %c0_i32_10 : i32
    scf.if %15 {
      %c0_11 = arith.constant 0 : index
      %c0_12 = arith.constant 0 : index
      %16 = vector.load %arg5[%c0_11, %c0_12] : memref<2x128xf32, #tpu.memory_space<vmem>>, vector<2x128xf32>
      %cst_13 = arith.constant 3.906250e-03 : f32
      %17 = vector.broadcast %cst_13 : f32 to vector<2x128xf32>
      %18 = arith.mulf %16, %17 : vector<2x128xf32>
      %c0_14 = arith.constant 0 : index
      %c0_15 = arith.constant 0 : index
      %19 = vector.load %arg4[%c0_14, %c0_15] : memref<1x128xf32, #tpu.memory_space<vmem>>, vector<1x128xf32>
      %20 = vector.broadcast %19 : vector<1x128xf32> to vector<2x128xf32>
      %21 = arith.addf %18, %20 : vector<2x128xf32>
      %c0_16 = arith.constant 0 : index
      %c0_17 = arith.constant 0 : index
      %22 = vector.load %arg5[%c0_16, %c0_17] : memref<2x128xf32, #tpu.memory_space<vmem>>, vector<2x128xf32>
      tpu.vector_store %arg5[%c0_16, %c0_17], %21 {strides = array<i32>} : memref<2x128xf32, #tpu.memory_space<vmem>>, vector<2x128xf32>,
    } else {
    }
    return
  }
  func.func @transform_0(%arg0: i32, %arg1: i32) -> (i32, i32, i32) {
    %c0_i32 = arith.constant 0 : i32
    %c0_i32_0 = arith.constant 0 : i32
    return %arg0, %arg1, %c0_i32 : i32, i32, i32
  }
  func.func @transform_1(%arg0: i32, %arg1: i32) -> (i32, i32) {
    %c0_i32 = arith.constant 0 : i32
    %c0_i32_0 = arith.constant 0 : i32
    %c0_i32_1 = arith.constant 0 : i32
    return %c0_i32, %c0_i32_0 : i32, i32
  }
  func.func @transform_2(%arg0: i32, %arg1: i32) -> (i32, i32) {
    %c0_i32 = arith.constant 0 : i32
    %c0_i32_0 = arith.constant 0 : i32
    %c0_i32_1 = arith.constant 0 : i32
    return %c0_i32, %c0_i32_0 : i32, i32
  }
  func.func @transform_3(%arg0: i32, %arg1: i32) -> (i32, i32) {
    %c0_i32 = arith.constant 0 : i32
    %c0_i32_0 = arith.constant 0 : i32
    return %arg0, %c0_i32 : i32, i32
  }
}

</mosaic_0001>

<llo_original>
// kernel: tpu_custom_call.1
$region0: #{tpu_custom_call.1}
  #allocation0 [shape = 'u32[]', space=smem, size = 0x4, offset = 0x4, fixed_abs, tag = 'smem constant byte address 0x4 - core index']
  #allocation1 [shape = 'u32[144,128]{1,0:T(1,128)}', space=vmem, size = 0x12000, scoped, tag = 'internal scratch']
  %s0 = inlined_call_operand.hbm [shape: f32[2,4,256], index: 0, kind: input, shape index: {}]
  %s1 = inlined_call_operand.hbm [shape: f32[4,128], index: 1, kind: input, shape index: {}]
  %s2 = inlined_call_operand.vmem [shape: f32[1,128], index: 2, kind: input, shape index: {}]
  %s3 = inlined_call_operand.hbm [shape: f32[2,128], index: 3, kind: output, shape index: {}]
  %s4 = sld [smem:[#allocation0]]
  $region38: #{tpu_custom_call.1} parent=0
    _
  %s6 = ssub.s32 1, %s4
  %s7 = scalar_select 0, %s6, %s4
  $region1: #{tpu_custom_call.1} parent=0
    #allocation2 [shape = 'u8[8192]{0}', space=vmem, size = 0x2000, scoped, tag = 'input window, operand 0, single buffered']
    #allocation3 [shape = 's32[1]{0}', space=sflag, size = 0x4, scoped, tag = 'scoped memory for tpu_custom_call.1']
    #allocation4 [shape = 's32[1]{0}', space=sflag, size = 0x4, scoped, tag = 'scoped memory for tpu_custom_call.1']
    #allocation5 [shape = 'u8[2048]{0}', space=vmem, size = 0x800, scoped, tag = 'input window, operand 1, single buffered']
    #allocation6 [shape = 's32[1]{0}', space=sflag, size = 0x4, scoped, tag = 'scoped memory for tpu_custom_call.1']
    #allocation7 [shape = 'u8[1024]{0}', space=vmem, size = 0x400, scoped, tag = 'output window, operand 0, single buffered']
    %8 = vsyncpa [#allocation3], 0
    %9 = vsyncpa [#allocation6], 0
    %10 = vsyncpa [#allocation4], 0
    // Predicated region
    $region2: #{tpu_custom_call.1} parent=1 // pred_check
      _
    $region3: #{tpu_custom_call.1} parent=1 // pred_check_branch
      %12 = sbr.rel (0) target = $region5
    $region4: #{tpu_custom_call.1} parent=1 // pred_region
      %s14 = ssub.s32 256, 256
      %15 = vsyncadd [#allocation3], %s14
      %s16 = sshll.u32 [#allocation2], 4
      %s17 = int_to_ptr.vmem [resolvable:$true] %s16
      %22 = dma.hbm_to_vmem [thread:$0]  %s0, 256, %s17, [#allocation3], 128, 128, 8
    $region5: #{tpu_custom_call.1} parent=1 // pred_fallthru
      _
    // Predicated region
    $region6: #{tpu_custom_call.1} parent=1 // pred_check
      _
    $region7: #{tpu_custom_call.1} parent=1 // pred_check_branch
      %24 = sbr.rel (0) target = $region9
    $region8: #{tpu_custom_call.1} parent=1 // pred_region
      %s26 = ssub.s32 64, 64
      %27 = vsyncadd [#allocation6], %s26
      %s29 = sshll.u32 [#allocation5], 4
      %s30 = int_to_ptr.vmem [resolvable:$true] %s29
      %32 = dma.hbm_to_vmem [thread:$0]  %s1, 64, %s30, [#allocation6]
    $region9: #{tpu_custom_call.1} parent=1 // pred_fallthru
      _
    // Predicated region
    $region10: #{tpu_custom_call.1} parent=1 // pred_check
      _
    $region11: #{tpu_custom_call.1} parent=1 // pred_check_branch
      %34 = sbr.rel (0) target = $region13
    $region12: #{tpu_custom_call.1} parent=1 // pred_region
      _
    $region13: #{tpu_custom_call.1} parent=1 // pred_fallthru
      _
    // Predicated region
    $region14: #{tpu_custom_call.1} parent=1 // pred_check
      _
    $region15: #{tpu_custom_call.1} parent=1 // pred_check_branch
      %36 = sbr.rel (0) target = $region17
    $region16: #{tpu_custom_call.1} parent=1 // pred_region
      %37 = dma.done [#allocation3], 256
    $region17: #{tpu_custom_call.1} parent=1 // pred_fallthru
      _
    // Predicated region
    $region18: #{tpu_custom_call.1} parent=1 // pred_check
      _
    $region19: #{tpu_custom_call.1} parent=1 // pred_check_branch
      %39 = sbr.rel (0) target = $region21
    $region20: #{tpu_custom_call.1} parent=1 // pred_region
      %40 = dma.done [#allocation6], 64
    $region21: #{tpu_custom_call.1} parent=1 // pred_fallthru
      _
    %p41 = scmp.eq.s32.totalorder 0, 0
    // Predicated region
    $region22: #{tpu_custom_call.1} parent=1 // pred_check
      %p42 = pneg %p41
    $region23: #{tpu_custom_call.1} parent=1 // pred_check_branch
      %44 = sbr.rel (%p42) target = $region25
    $region24: #{tpu_custom_call.1} parent=1 // pred_region
      %45 = vst [vmem:[#allocation7] sm:$0x3] 0.0
    $region25: #{tpu_custom_call.1} parent=1 // pred_fallthru
      _
    %v46 = vld [vmem:[#allocation2] sm:$0xff]
    %v47 = vld [vmem:[#allocation2 + $0x8] sm:$0xff]
    %v50 = vcombine.high %v46, %v46
    %v51 = vcombine.high %v47, %v47
    %vm54 = vcmask 1043456
    %v55 = vsel %vm54, %v46, 0.0
    %v56 = vsel %vm54, %v50, 0.0
    %v57 = vadd.f32 %v55, %v56
    %58 = vadd.xlane.f32.xlu0 %v57
    %v59 = vpop.xlane.xlu0 %58
    %v60 = vsel %vm54, %v47, 0.0
    %v61 = vsel %vm54, %v51, 0.0
    %v62 = vadd.f32 %v60, %v61
    %63 = vadd.xlane.f32.xlu0 %v62
    %v64 = vpop.xlane.xlu0 %63
    %s65 = smul.u32 0, 4
    %s66 = scalar_lea.vmem [#allocation5], %s65
    %v67 = vld [vmem:[%s66] sm:$0xf]
    %v68 = vld [vmem:[#allocation7] sm:$0x3]
    %v71 = vlaneseq
    %v72 = vand.u32 %v71, 127
    %v73 = vlaneseq
    %v74 = vshrl.u32 %v73, 7
    %v75 = vsub.s32 %v72, %v74
    %v76 = vrot.slane %v59, %v75
    %v77 = vlaneseq
    %v78 = vshrl.u32 %v77, 7
    %v79 = vsub.s32 %v72, %v78
    %v80 = vrot.slane %v64, %v79
    %vm81 = vcmask 1041409
    %v82 = vsel %vm81, %v80, %v76
    %vm83 = vcmask 31744
    %v84 = vsel %vm83, %v82, 0
    %v87 = vsel %vm54, %v67, 0
    %89 = vmatprep.subr.mxu0 0.0
    %90 = vmatpush1.msra.mxu0 0.0
    %91 = vmatprep.subr.mxu0 0.0
    %92 = vmatpush1.msra.mxu0 0.0
    %93 = vmatprep.subr.mxu0 0.0
    %94 = vmatpush1.msra.mxu0 0.0
    %95 = vmatprep.subr.mxu0 0.0
    %96 = vmatpush1.msra.mxu0 0.0
    %97 = vmatprep.subr.mxu0 0.0
    %98 = vmatpush1.msra.mxu0 0.0
    %99 = vmatprep.subr.mxu0 0.0
    %100 = vmatpush1.msra.mxu0 0.0
    %101 = vmatprep.subr.mxu0 0.0
    %102 = vmatpush1.msra.mxu0 0.0
    %103 = vmatprep.subr.mxu0 0.0
    %104 = vmatpush1.msra.mxu0 0.0
    %105 = vmatprep.subr.mxu0 0.0
    %106 = vmatpush1.msra.mxu0 0.0
    %107 = vmatprep.subr.mxu0 0.0
    %108 = vmatpush1.msra.mxu0 0.0
    %109 = vmatprep.subr.mxu0 0.0
    %110 = vmatpush1.msra.mxu0 0.0
    %111 = vmatprep.subr.mxu0 0.0
    %112 = vmatpush1.msra.mxu0 0.0
    %113 = vmatprep.subr.mxu0 0.0
    %114 = vmatpush1.msra.mxu0 0.0
    %115 = vmatprep.subr.mxu0 0.0
    %116 = vmatpush1.msra.mxu0 0.0
    %117 = vmatprep.subr.mxu0 0.0
    %118 = vmatpush1.msra.mxu0 0.0
    %119 = vmatprep.subr.mxu0 0.0
    %120 = vmatpush1.msra.mxu0 %v87
    %121 = vmatprep.subr.mxu0 0.0
    %122 = vmatpush2.msra.mxu0 0.0
    %123 = vmatprep.subr.mxu0 0.0
    %124 = vmatpush2.msra.mxu0 0.0
    %125 = vmatprep.subr.mxu0 0.0
    %126 = vmatpush2.msra.mxu0 0.0
    %127 = vmatprep.subr.mxu0 0.0
    %128 = vmatpush2.msra.mxu0 0.0
    %129 = vmatprep.subr.mxu0 0.0
    %130 = vmatpush2.msra.mxu0 0.0
    %131 = vmatprep.subr.mxu0 0.0
    %132 = vmatpush2.msra.mxu0 0.0
    %133 = vmatprep.subr.mxu0 0.0
    %134 = vmatpush2.msra.mxu0 0.0
    %135 = vmatprep.subr.mxu0 0.0
    %136 = vmatpush2.msra.mxu0 0.0
    %137 = vmatprep.subr.mxu0 0.0
    %138 = vmatpush2.msra.mxu0 0.0
    %139 = vmatprep.subr.mxu0 0.0
    %140 = vmatpush2.msra.mxu0 0.0
    %141 = vmatprep.subr.mxu0 0.0
    %142 = vmatpush2.msra.mxu0 0.0
    %143 = vmatprep.subr.mxu0 0.0
    %144 = vmatpush2.msra.mxu0 0.0
    %145 = vmatprep.subr.mxu0 0.0
    %146 = vmatpush2.msra.mxu0 0.0
    %147 = vmatprep.subr.mxu0 0.0
    %148 = vmatpush2.msra.mxu0 0.0
    %149 = vmatprep.subr.mxu0 0.0
    %150 = vmatpush2.msra.mxu0 0.0
    %151 = vmatprep.subr.mxu0 0.0
    %152 = vmatpush2.msra.mxu0 0.0
    %153 = vmatprep.mubr.f32.mxu0 0.0
    %154 = vmatmul.mubr.f32.gmra.mxu0 %v84
    %v155 = vpop.f32.mrf.mxu0
    %v156 = vadd.f32 0.0, %v155
    %v157 = vpop.f32.mrf.mxu0
    %158 = vdwg.mxu0
    %v159 = vadd.f32 %v68, %v156
    %160 = vst [vmem:[#allocation7] sm:$0x3] %v159
    // Predicated region
    $region26: #{tpu_custom_call.1} parent=1 // pred_check
      %p161 = pneg %p41
    $region27: #{tpu_custom_call.1} parent=1 // pred_check_branch
      %163 = sbr.rel (%p161) target = $region29
    $region28: #{tpu_custom_call.1} parent=1 // pred_region
      %v164 = vld [vmem:[#allocation7] sm:$0x3]
      %v165 = vmul.f32 %v164, 0.00390625
      %v166 = vld [vmem:[%s2] sm:$0x1]
      %v168 = vlaneseq
      %v169 = vshrl.u32 %v168, 7
      %v170 = vsub.s32 0, %v169
      %v171 = vrot.slane %v166, %v170
      %v173 = vadd.f32 %v165, %v171
      %174 = vst [vmem:[#allocation7] sm:$0x3] %v173
    $region29: #{tpu_custom_call.1} parent=1 // pred_fallthru
      _
    // Predicated region
    $region30: #{tpu_custom_call.1} parent=1 // pred_check
      _
    $region31: #{tpu_custom_call.1} parent=1 // pred_check_branch
      %176 = sbr.rel (0) target = $region33
    $region32: #{tpu_custom_call.1} parent=1 // pred_region
      %s178 = ssub.s32 32, 32
      %179 = vsyncadd [#allocation4], %s178
      %s181 = sshll.u32 [#allocation7], 4
      %s182 = int_to_ptr.vmem [resolvable:$true] %s181
      %184 = dma.vmem_to_hbm [thread:$0]  %s182, 32, %s3, [#allocation4]
    $region33: #{tpu_custom_call.1} parent=1 // pred_fallthru
      _
    // Predicated region
    $region34: #{tpu_custom_call.1} parent=1 // pred_check
      _
    $region35: #{tpu_custom_call.1} parent=1 // pred_check_branch
      %186 = sbr.rel (0) target = $region37
    $region36: #{tpu_custom_call.1} parent=1 // pred_region
      %187 = dma.done [#allocation4], 32
    $region37: #{tpu_custom_call.1} parent=1 // pred_fallthru
      _
    %188 = vsyncpa [#allocation3], 1
    %189 = vsyncpa [#allocation6], 1
    %190 = vsyncpa [#allocation4], 1

</llo_original>
